<compile_context>
chip_gen: v5e
topology: v5e:2x2
jax: 0.10.0
libtpu: 0.0.40
codegen_flags: <defaults>
</compile_context>

<pallas_src>
import functools

import jax
import jax.numpy as jnp
from jax.experimental import pallas as pl
from jax.experimental.pallas import tpu as pltpu


def _round_up(x, m):
    return ((x + m - 1) // m) * m


# ------------------------- fused Pallas kernel -------------------------

def _fused_mlp_kernel(*refs, num_layers, acts):
    # refs = (x_ref, w_0..w_{L-1}, shift_0..shift_{L-1}, o_ref)
    x_ref = refs[0]
    w_refs = refs[1:1 + num_layers]
    s_refs = refs[1 + num_layers:1 + 2 * num_layers]
    o_ref = refs[1 + 2 * num_layers]

    h = x_ref[...]                                            # (tm, K0) bf16
    y = None
    for li in range(num_layers):                              # statically unrolled
        y = jnp.dot(h, w_refs[li][...],
                    preferred_element_type=jnp.float32)       # MXU bf16 -> f32 acc
        y = y + s_refs[li][...]                               # folded BN shift / bias (f32)
        if acts[li]:
            y = jnp.where(y >= 0.0, y, 0.2 * y)               # LeakyReLU(0.2)
        if li + 1 < num_layers:
            h = y.astype(jnp.bfloat16)                        # next MXU layer in bf16
    o_ref[...] = y.astype(o_ref.dtype)                        # lane-dense (tm, 128) store


@functools.partial(jax.jit, static_argnames=("out_channels", "acts", "block_rows"))
def selection_mlp_forward(x, weights, shifts, *, out_channels, acts, block_rows=256):
    """x: (M, in_channels) -> (M, out_channels) f32, single fused pallas_call."""
    M, K = x.shape
    num_layers = len(weights)
    n_pad = weights[-1].shape[1]                              # lane-padded final width (128)

    # M tiling: tile rows of points; tm multiple of 16 (bf16 sublane pack), pad + slice.
    tm = min(block_rows, _round_up(M, 16))
    m_pad = _round_up(M, tm)
    if m_pad != M:
        x = jnp.pad(x, ((0, m_pad - M), (0, 0)))
    x = x.astype(jnp.bfloat16)

    grid = (m_pad // tm,)

    in_specs = [pl.BlockSpec((tm, K), lambda i: (i, 0))]                       # x: streamed
    in_specs += [pl.BlockSpec(w.shape, lambda i: (0, 0)) for w in weights]     # resident
    in_specs += [pl.BlockSpec(s.shape, lambda i: (0, 0)) for s in shifts]      # resident
    out_specs = pl.BlockSpec((tm, n_pad), lambda i: (i, 0))                    # lane-dense

    flops = 2 * m_pad * sum(int(w.shape[0]) * int(w.shape[1]) for w in weights)
    bytes_accessed = (int(x.size) * x.dtype.itemsize
                      + sum(int(w.size) * w.dtype.itemsize for w in weights)
                      + sum(int(s.size) * s.dtype.itemsize for s in shifts)
                      + m_pad * n_pad * 4)

    kernel = functools.partial(_fused_mlp_kernel, num_layers=num_layers, acts=acts)
    out = pl.pallas_call(
        kernel,
        out_shape=jax.ShapeDtypeStruct((m_pad, n_pad), jnp.float32),
        grid_spec=pl.GridSpec(
            grid=grid,
            in_specs=in_specs,
            out_specs=out_specs,
        ),
        compiler_params=pltpu.CompilerParams(
            dimension_semantics=("parallel",),                # v7x: shard M tiles over 2 TCs
        ),
        cost_estimate=pl.CostEstimate(
            flops=flops, transcendentals=0, bytes_accessed=bytes_accessed),
    )(x, *weights, *shifts)

    return out[:M, :out_channels]


# ------------------------- parameter setup (plain JAX glue) -------------------------

def init_selection_mlp_params(key, in_channels, out_channels, expand_dim=256,
                              lane_pad=128, eps=1e-5):
    """Deterministic synthetic eval-mode parameters matching the torch layer shapes.

    Returns (weights, shifts, acts):
      - weights[i]: (d_in, d_out) bf16, == torch weight.T with BN scale pre-folded in
      - shifts[i]:  (1, d_out) f32, == BN (beta - mean*scale) or the final bias
      - acts[i]:    bool, LeakyReLU(0.2) applied or not
    The final (narrow) layer is zero-padded to `lane_pad` output channels.
    """
    dims = [in_channels,
            expand_dim // 8, expand_dim // 4, expand_dim // 2, expand_dim,
            out_channels]
    weights, shifts, acts = [], [], []
    for i in range(5):
        d_in, d_out = dims[i], dims[i + 1]
        key, kw, kg, kb, km, kv, kbias = jax.random.split(key, 7)
        w = (jax.random.normal(kw, (d_in, d_out), jnp.float32)
             * (1.0 / jnp.sqrt(jnp.float32(d_in))))           # Linear weight, stored (in, out)
        if i < 4:
            # BatchNorm1d running stats (inference mode) folded into scale/shift,
            # then the scale folded straight into the weight columns.
            gamma = 1.0 + 0.1 * jax.random.normal(kg, (d_out,), jnp.float32)
            beta = 0.1 * jax.random.normal(kb, (d_out,), jnp.float32)
            running_mean = 0.1 * jax.random.normal(km, (d_out,), jnp.float32)
            running_var = 1.0 + 0.1 * jax.random.uniform(kv, (d_out,), jnp.float32)
            scale = gamma / jnp.sqrt(running_var + eps)
            shift = beta - running_mean * scale
            w = w * scale[None, :]
            act = True
        else:
            # Final Conv1x1(activation=None): Linear with bias, no BN, no activation.
            bias = 0.1 * jax.random.normal(kbias, (d_out,), jnp.float32)
            shift = bias
            act = False
            pad = lane_pad - d_out
            if pad > 0:                                       # lane-dense final store
                w = jnp.pad(w, ((0, 0), (0, pad)))
                shift = jnp.pad(shift, ((0, pad),))
        weights.append(w.astype(jnp.bfloat16))
        shifts.append(shift.reshape(1, -1).astype(jnp.float32))
        acts.append(act)
    return tuple(weights), tuple(shifts), tuple(acts)


# ------------------------- reference (pure JAX, same bf16 math) -------------------------

def selection_mlp_forward_ref(x, weights, shifts, *, out_channels, acts):
    h = x.astype(jnp.bfloat16)
    y = None
    for li, (w, s, a) in enumerate(zip(weights, shifts, acts)):
        y = jnp.dot(h, w, preferred_element_type=jnp.float32) + s
        if a:
            y = jnp.where(y >= 0.0, y, 0.2 * y)
        if li + 1 < len(weights):
            h = y.astype(jnp.bfloat16)
    return y[:, :out_channels]


# ------------------------- main -------------------------

if __name__ == "__main__":
    batch = 16
    in_channels = 16
    out_channels = 8
    expand_dim = 256          # hidden dims: 32, 64, 128, 256

    key = jax.random.PRNGKey(0)
    kx, kp = jax.random.split(key)
    x = jax.random.normal(kx, (batch, in_channels), jnp.float32)
    weights, shifts, acts = init_selection_mlp_params(
        kp, in_channels, out_channels, expand_dim)

    out = jax.block_until_ready(
        selection_mlp_forward(x, weights, shifts,
                              out_channels=out_channels, acts=acts))
    ref = jax.block_until_ready(
        selection_mlp_forward_ref(x, weights, shifts,
                                  out_channels=out_channels, acts=acts))

    assert out.shape == (batch, out_channels), out.shape
    assert jnp.allclose(out, ref, atol=1e-2, rtol=1e-2), "mismatch vs. JAX reference"
    print("KERNEL_OK")
</pallas_src>

<mosaic_0001>
module attributes {stable_mosaic.version = 11 : i64} {
  func.func @_fused_mlp_kernel(%arg0: i32, %arg1: memref<16x16xbf16, #tpu.memory_space<vmem>>, %arg2: memref<16x32xbf16, #tpu.memory_space<vmem>>, %arg3: memref<32x64xbf16, #tpu.memory_space<vmem>>, %arg4: memref<64x128xbf16, #tpu.memory_space<vmem>>, %arg5: memref<128x256xbf16, #tpu.memory_space<vmem>>, %arg6: memref<256x128xbf16, #tpu.memory_space<vmem>>, %arg7: memref<1x32xf32, #tpu.memory_space<vmem>>, %arg8: memref<1x64xf32, #tpu.memory_space<vmem>>, %arg9: memref<1x128xf32, #tpu.memory_space<vmem>>, %arg10: memref<1x256xf32, #tpu.memory_space<vmem>>, %arg11: memref<1x128xf32, #tpu.memory_space<vmem>>, %arg12: memref<16x128xf32, #tpu.memory_space<vmem>>) attributes {dimension_semantics = [#tpu.dimension_semantics<parallel>], iteration_bounds = array<i64: 1>, scalar_prefetch = 0 : i64, scratch_operands = 0 : i64, tpu.core_type = #tpu.core_type<tc>, window_params = [{transform_indices = @transform_0, window_bounds = array<i64: 16, 16>}, {pipeline_mode = #tpu.pipeline_mode<synchronous>, transform_indices = @transform_1, window_bounds = array<i64: 16, 32>}, {pipeline_mode = #tpu.pipeline_mode<synchronous>, transform_indices = @transform_2, window_bounds = array<i64: 32, 64>}, {pipeline_mode = #tpu.pipeline_mode<synchronous>, transform_indices = @transform_3, window_bounds = array<i64: 64, 128>}, {pipeline_mode = #tpu.pipeline_mode<synchronous>, transform_indices = @transform_4, window_bounds = array<i64: 128, 256>}, {pipeline_mode = #tpu.pipeline_mode<synchronous>, transform_indices = @transform_5, window_bounds = array<i64: 256, 128>}, {pipeline_mode = #tpu.pipeline_mode<synchronous>, transform_indices = @transform_6, window_bounds = array<i64: 1, 32>}, {pipeline_mode = #tpu.pipeline_mode<synchronous>, transform_indices = @transform_7, window_bounds = array<i64: 1, 64>}, {pipeline_mode = #tpu.pipeline_mode<synchronous>, transform_indices = @transform_8, window_bounds = array<i64: 1, 128>}, {pipeline_mode = #tpu.pipeline_mode<synchronous>, transform_indices = @transform_9, window_bounds = array<i64: 1, 256>}, {pipeline_mode = #tpu.pipeline_mode<synchronous>, transform_indices = @transform_10, window_bounds = array<i64: 1, 128>}, {transform_indices = @transform_11, window_bounds = array<i64: 16, 128>}]} {
    %c0 = arith.constant 0 : index
    %c0_0 = arith.constant 0 : index
    %0 = vector.load %arg1[%c0, %c0_0] : memref<16x16xbf16, #tpu.memory_space<vmem>>, vector<16x16xbf16>
    %c0_1 = arith.constant 0 : index
    %c0_2 = arith.constant 0 : index
    %1 = vector.load %arg2[%c0_1, %c0_2] : memref<16x32xbf16, #tpu.memory_space<vmem>>, vector<16x32xbf16>
    %cst = arith.constant dense<0.000000e+00> : vector<16x32xf32>
    %2 = tpu.matmul %0, %1, %cst {dimension_numbers = #tpu.dot_dimension_numbers<[1], [0], [0], [1], [0, 0, 1, 1], [], []>} : vector<16x16xbf16>, vector<16x32xbf16>, vector<16x32xf32> -> vector<16x32xf32>
    %c0_3 = arith.constant 0 : index
    %c0_4 = arith.constant 0 : index
    %3 = vector.load %arg7[%c0_3, %c0_4] : memref<1x32xf32, #tpu.memory_space<vmem>>, vector<1x32xf32>
    %4 = vector.broadcast %3 : vector<1x32xf32> to vector<16x32xf32>
    %5 = arith.addf %2, %4 : vector<16x32xf32>
    %cst_5 = arith.constant 0.000000e+00 : f32
    %6 = vector.broadcast %cst_5 : f32 to vector<16x32xf32>
    %7 = arith.cmpf oge, %5, %6 : vector<16x32xf32>
    %cst_6 = arith.constant 2.000000e-01 : f32
    %8 = vector.broadcast %cst_6 : f32 to vector<16x32xf32>
    %9 = arith.mulf %8, %5 : vector<16x32xf32>
    %10 = arith.select %7, %5, %9 : vector<16x32xi1>, vector<16x32xf32>
    %11 = arith.truncf %10 : vector<16x32xf32> to vector<16x32xbf16>
    %c0_7 = arith.constant 0 : index
    %c0_8 = arith.constant 0 : index
    %12 = vector.load %arg3[%c0_7, %c0_8] : memref<32x64xbf16, #tpu.memory_space<vmem>>, vector<32x64xbf16>
    %cst_9 = arith.constant dense<0.000000e+00> : vector<16x64xf32>
    %13 = tpu.matmul %11, %12, %cst_9 {dimension_numbers = #tpu.dot_dimension_numbers<[1], [0], [0], [1], [0, 0, 1, 1], [], []>} : vector<16x32xbf16>, vector<32x64xbf16>, vector<16x64xf32> -> vector<16x64xf32>
    %c0_10 = arith.constant 0 : index
    %c0_11 = arith.constant 0 : index
    %14 = vector.load %arg8[%c0_10, %c0_11] : memref<1x64xf32, #tpu.memory_space<vmem>>, vector<1x64xf32>
    %15 = vector.broadcast %14 : vector<1x64xf32> to vector<16x64xf32>
    %16 = arith.addf %13, %15 : vector<16x64xf32>
    %cst_12 = arith.constant 0.000000e+00 : f32
    %17 = vector.broadcast %cst_12 : f32 to vector<16x64xf32>
    %18 = arith.cmpf oge, %16, %17 : vector<16x64xf32>
    %cst_13 = arith.constant 2.000000e-01 : f32
    %19 = vector.broadcast %cst_13 : f32 to vector<16x64xf32>
    %20 = arith.mulf %19, %16 : vector<16x64xf32>
    %21 = arith.select %18, %16, %20 : vector<16x64xi1>, vector<16x64xf32>
    %22 = arith.truncf %21 : vector<16x64xf32> to vector<16x64xbf16>
    %c0_14 = arith.constant 0 : index
    %c0_15 = arith.constant 0 : index
    %23 = vector.load %arg4[%c0_14, %c0_15] : memref<64x128xbf16, #tpu.memory_space<vmem>>, vector<64x128xbf16>
    %cst_16 = arith.constant dense<0.000000e+00> : vector<16x128xf32>
    %24 = tpu.matmul %22, %23, %cst_16 {dimension_numbers = #tpu.dot_dimension_numbers<[1], [0], [0], [1], [0, 0, 1, 1], [], []>} : vector<16x64xbf16>, vector<64x128xbf16>, vector<16x128xf32> -> vector<16x128xf32>
    %c0_17 = arith.constant 0 : index
    %c0_18 = arith.constant 0 : index
    %25 = vector.load %arg9[%c0_17, %c0_18] : memref<1x128xf32, #tpu.memory_space<vmem>>, vector<1x128xf32>
    %26 = vector.broadcast %25 : vector<1x128xf32> to vector<16x128xf32>
    %27 = arith.addf %24, %26 : vector<16x128xf32>
    %cst_19 = arith.constant 0.000000e+00 : f32
    %28 = vector.broadcast %cst_19 : f32 to vector<16x128xf32>
    %29 = arith.cmpf oge, %27, %28 : vector<16x128xf32>
    %cst_20 = arith.constant 2.000000e-01 : f32
    %30 = vector.broadcast %cst_20 : f32 to vector<16x128xf32>
    %31 = arith.mulf %30, %27 : vector<16x128xf32>
    %32 = arith.select %29, %27, %31 : vector<16x128xi1>, vector<16x128xf32>
    %33 = arith.truncf %32 : vector<16x128xf32> to vector<16x128xbf16>
    %c0_21 = arith.constant 0 : index
    %c0_22 = arith.constant 0 : index
    %34 = vector.load %arg5[%c0_21, %c0_22] : memref<128x256xbf16, #tpu.memory_space<vmem>>, vector<128x256xbf16>
    %cst_23 = arith.constant dense<0.000000e+00> : vector<16x256xf32>
    %35 = tpu.matmul %33, %34, %cst_23 {dimension_numbers = #tpu.dot_dimension_numbers<[1], [0], [0], [1], [0, 0, 1, 1], [], []>} : vector<16x128xbf16>, vector<128x256xbf16>, vector<16x256xf32> -> vector<16x256xf32>
    %c0_24 = arith.constant 0 : index
    %c0_25 = arith.constant 0 : index
    %36 = vector.load %arg10[%c0_24, %c0_25] : memref<1x256xf32, #tpu.memory_space<vmem>>, vector<1x256xf32>
    %37 = vector.broadcast %36 : vector<1x256xf32> to vector<16x256xf32>
    %38 = arith.addf %35, %37 : vector<16x256xf32>
    %cst_26 = arith.constant 0.000000e+00 : f32
    %39 = vector.broadcast %cst_26 : f32 to vector<16x256xf32>
    %40 = arith.cmpf oge, %38, %39 : vector<16x256xf32>
    %cst_27 = arith.constant 2.000000e-01 : f32
    %41 = vector.broadcast %cst_27 : f32 to vector<16x256xf32>
    %42 = arith.mulf %41, %38 : vector<16x256xf32>
    %43 = arith.select %40, %38, %42 : vector<16x256xi1>, vector<16x256xf32>
    %44 = arith.truncf %43 : vector<16x256xf32> to vector<16x256xbf16>
    %c0_28 = arith.constant 0 : index
    %c0_29 = arith.constant 0 : index
    %45 = vector.load %arg6[%c0_28, %c0_29] : memref<256x128xbf16, #tpu.memory_space<vmem>>, vector<256x128xbf16>
    %cst_30 = arith.constant dense<0.000000e+00> : vector<16x128xf32>
    %46 = tpu.matmul %44, %45, %cst_30 {dimension_numbers = #tpu.dot_dimension_numbers<[1], [0], [0], [1], [0, 0, 1, 1], [], []>} : vector<16x256xbf16>, vector<256x128xbf16>, vector<16x128xf32> -> vector<16x128xf32>
    %c0_31 = arith.constant 0 : index
    %c0_32 = arith.constant 0 : index
    %47 = vector.load %arg11[%c0_31, %c0_32] : memref<1x128xf32, #tpu.memory_space<vmem>>, vector<1x128xf32>
    %48 = vector.broadcast %47 : vector<1x128xf32> to vector<16x128xf32>
    %49 = arith.addf %46, %48 : vector<16x128xf32>
    %c0_33 = arith.constant 0 : index
    %c0_34 = arith.constant 0 : index
    %50 = vector.load %arg12[%c0_33, %c0_34] : memref<16x128xf32, #tpu.memory_space<vmem>>, vector<16x128xf32>
    tpu.vector_store %arg12[%c0_33, %c0_34], %49 {strides = array<i32>} : memref<16x128xf32, #tpu.memory_space<vmem>>, vector<16x128xf32>,
    return
  }
  func.func @transform_0(%arg0: i32) -> (i32, i32) {
    %c0_i32 = arith.constant 0 : i32
    %c0_i32_0 = arith.constant 0 : i32
    return %arg0, %c0_i32 : i32, i32
  }
  func.func @transform_1(%arg0: i32) -> (i32, i32) {
    %c0_i32 = arith.constant 0 : i32
    %c0_i32_0 = arith.constant 0 : i32
    %c0_i32_1 = arith.constant 0 : i32
    return %c0_i32, %c0_i32_0 : i32, i32
  }
  func.func @transform_2(%arg0: i32) -> (i32, i32) {
    %c0_i32 = arith.constant 0 : i32
    %c0_i32_0 = arith.constant 0 : i32
    %c0_i32_1 = arith.constant 0 : i32
    return %c0_i32, %c0_i32_0 : i32, i32
  }
  func.func @transform_3(%arg0: i32) -> (i32, i32) {
    %c0_i32 = arith.constant 0 : i32
    %c0_i32_0 = arith.constant 0 : i32
    %c0_i32_1 = arith.constant 0 : i32
    return %c0_i32, %c0_i32_0 : i32, i32
  }
  func.func @transform_4(%arg0: i32) -> (i32, i32) {
    %c0_i32 = arith.constant 0 : i32
    %c0_i32_0 = arith.constant 0 : i32
    %c0_i32_1 = arith.constant 0 : i32
    return %c0_i32, %c0_i32_0 : i32, i32
  }
  func.func @transform_5(%arg0: i32) -> (i32, i32) {
    %c0_i32 = arith.constant 0 : i32
    %c0_i32_0 = arith.constant 0 : i32
    %c0_i32_1 = arith.constant 0 : i32
    return %c0_i32, %c0_i32_0 : i32, i32
  }
  func.func @transform_6(%arg0: i32) -> (i32, i32) {
    %c0_i32 = arith.constant 0 : i32
    %c0_i32_0 = arith.constant 0 : i32
    %c0_i32_1 = arith.constant 0 : i32
    return %c0_i32, %c0_i32_0 : i32, i32
  }
  func.func @transform_7(%arg0: i32) -> (i32, i32) {
    %c0_i32 = arith.constant 0 : i32
    %c0_i32_0 = arith.constant 0 : i32
    %c0_i32_1 = arith.constant 0 : i32
    return %c0_i32, %c0_i32_0 : i32, i32
  }
  func.func @transform_8(%arg0: i32) -> (i32, i32) {
    %c0_i32 = arith.constant 0 : i32
    %c0_i32_0 = arith.constant 0 : i32
    %c0_i32_1 = arith.constant 0 : i32
    return %c0_i32, %c0_i32_0 : i32, i32
  }
  func.func @transform_9(%arg0: i32) -> (i32, i32) {
    %c0_i32 = arith.constant 0 : i32
    %c0_i32_0 = arith.constant 0 : i32
    %c0_i32_1 = arith.constant 0 : i32
    return %c0_i32, %c0_i32_0 : i32, i32
  }
  func.func @transform_10(%arg0: i32) -> (i32, i32) {
    %c0_i32 = arith.constant 0 : i32
    %c0_i32_0 = arith.constant 0 : i32
    %c0_i32_1 = arith.constant 0 : i32
    return %c0_i32, %c0_i32_0 : i32, i32
  }
  func.func @transform_11(%arg0: i32) -> (i32, i32) {
    %c0_i32 = arith.constant 0 : i32
    %c0_i32_0 = arith.constant 0 : i32
    return %arg0, %c0_i32 : i32, i32
  }
}

</mosaic_0001>

<llo_original>
// kernel: selection_mlp_forward.1
$region0: #{selection_mlp_forward.1}
  #allocation0 [shape = 'u32[]', space=smem, size = 0x4, offset = 0x4, fixed_abs, tag = 'smem constant byte address 0x4 - core index']
  #allocation1 [shape = 'u32[72,128]{1,0:T(1,128)}', space=vmem, size = 0x9000, scoped, tag = 'internal scratch']
  %s0 = inlined_call_operand.vmem [shape: bf16[16,16], index: 0, kind: input, shape index: {}]
  %s1 = inlined_call_operand.vmem [shape: bf16[16,32], index: 1, kind: input, shape index: {}]
  %s2 = inlined_call_operand.vmem [shape: bf16[32,64], index: 2, kind: input, shape index: {}]
  %s3 = inlined_call_operand.hbm [shape: bf16[64,128], index: 3, kind: input, shape index: {}]
  %s4 = inlined_call_operand.hbm [shape: bf16[128,256], index: 4, kind: input, shape index: {}]
  %s5 = inlined_call_operand.hbm [shape: bf16[256,128], index: 5, kind: input, shape index: {}]
  %s6 = inlined_call_operand.vmem [shape: f32[1,32], index: 6, kind: input, shape index: {}]
  %s7 = inlined_call_operand.vmem [shape: f32[1,64], index: 7, kind: input, shape index: {}]
  %s8 = inlined_call_operand.vmem [shape: f32[1,128], index: 8, kind: input, shape index: {}]
  %s9 = inlined_call_operand.vmem [shape: f32[1,256], index: 9, kind: input, shape index: {}]
  %s10 = inlined_call_operand.vmem [shape: f32[1,128], index: 10, kind: input, shape index: {}]
  %s11 = inlined_call_operand.vmem [shape: f32[16,128], index: 11, kind: output, shape index: {}]
  %s12 = sld [smem:[#allocation0]]
  $region66: #{selection_mlp_forward.1} parent=0
    _
  %s14 = ssub.s32 1, %s12
  %s15 = scalar_select 0, %s14, %s12
  $region1: #{selection_mlp_forward.1} parent=0
    #allocation2 [shape = 'u8[16384]{0}', space=vmem, size = 0x4000, scoped, tag = 'input window, operand 3, single buffered']
    #allocation3 [shape = 's32[1]{0}', space=sflag, size = 0x4, scoped, tag = 'scoped memory for selection_mlp_forward.1']
    #allocation4 [shape = 'u8[65536]{0}', space=vmem, size = 0x10000, scoped, tag = 'input window, operand 4, single buffered']
    #allocation5 [shape = 's32[1]{0}', space=sflag, size = 0x4, scoped, tag = 'scoped memory for selection_mlp_forward.1']
    #allocation6 [shape = 'u8[65536]{0}', space=vmem, size = 0x10000, scoped, tag = 'input window, operand 5, single buffered']
    %16 = vsyncpa [#allocation3], 0
    %17 = vsyncpa [#allocation5], 0
    // Predicated region
    $region2: #{selection_mlp_forward.1} parent=1 // pred_check
      _
    $region3: #{selection_mlp_forward.1} parent=1 // pred_check_branch
      %19 = sbr.rel (0) target = $region5
    $region4: #{selection_mlp_forward.1} parent=1 // pred_region
      _
    $region5: #{selection_mlp_forward.1} parent=1 // pred_fallthru
      _
    // Predicated region
    $region6: #{selection_mlp_forward.1} parent=1 // pred_check
      _
    $region7: #{selection_mlp_forward.1} parent=1 // pred_check_branch
      %21 = sbr.rel (0) target = $region9
    $region8: #{selection_mlp_forward.1} parent=1 // pred_region
      _
    $region9: #{selection_mlp_forward.1} parent=1 // pred_fallthru
      _
    // Predicated region
    $region10: #{selection_mlp_forward.1} parent=1 // pred_check
      _
    $region11: #{selection_mlp_forward.1} parent=1 // pred_check_branch
      %23 = sbr.rel (0) target = $region13
    $region12: #{selection_mlp_forward.1} parent=1 // pred_region
      _
    $region13: #{selection_mlp_forward.1} parent=1 // pred_fallthru
      _
    // Predicated region
    $region14: #{selection_mlp_forward.1} parent=1 // pred_check
      _
    $region15: #{selection_mlp_forward.1} parent=1 // pred_check_branch
      %25 = sbr.rel (0) target = $region17
    $region16: #{selection_mlp_forward.1} parent=1 // pred_region
      %27 = vsyncadd [#allocation3], 0
      %s28 = sshll.u32 %s3, 4
      %s29 = int_to_ptr.hbm [resolvable:$true] %s28
      %s30 = sshll.u32 [#allocation2], 4
      %s31 = int_to_ptr.vmem [resolvable:$true] %s30
      %36 = dma.hbm_to_vmem [thread:$0]  %s29, 512, %s31, [#allocation3], 64, 64, 4
    $region17: #{selection_mlp_forward.1} parent=1 // pred_fallthru
      _
    // Predicated region
    $region18: #{selection_mlp_forward.1} parent=1 // pred_check
      _
    $region19: #{selection_mlp_forward.1} parent=1 // pred_check_branch
      %38 = sbr.rel (0) target = $region21
    $region20: #{selection_mlp_forward.1} parent=1 // pred_region
      %40 = vsyncadd [#allocation5], 0
      %s41 = sshll.u32 %s4, 4
      %s42 = int_to_ptr.hbm [resolvable:$true] %s41
      %s43 = sshll.u32 [#allocation4], 4
      %s44 = int_to_ptr.vmem [resolvable:$true] %s43
      %49 = dma.hbm_to_vmem [thread:$0]  %s42, 2048, %s44, [#allocation5], 128, 128, 8
    $region21: #{selection_mlp_forward.1} parent=1 // pred_fallthru
      _
    // Predicated region
    $region22: #{selection_mlp_forward.1} parent=1 // pred_check
      _
    $region23: #{selection_mlp_forward.1} parent=1 // pred_check_branch
      %51 = sbr.rel (0) target = $region25
    $region24: #{selection_mlp_forward.1} parent=1 // pred_region
      %53 = vsyncadd [#allocation5], 0
      %s54 = sshll.u32 %s5, 4
      %s55 = int_to_ptr.hbm [resolvable:$true] %s54
      %s56 = sshll.u32 [#allocation6], 4
      %s57 = int_to_ptr.vmem [resolvable:$true] %s56
      %62 = dma.hbm_to_vmem [thread:$0]  %s55, 2048, %s57, [#allocation5], 64, 64, 4
    $region25: #{selection_mlp_forward.1} parent=1 // pred_fallthru
      _
    // Predicated region
    $region26: #{selection_mlp_forward.1} parent=1 // pred_check
      _
    $region27: #{selection_mlp_forward.1} parent=1 // pred_check_branch
      %64 = sbr.rel (0) target = $region29
    $region28: #{selection_mlp_forward.1} parent=1 // pred_region
      _
    $region29: #{selection_mlp_forward.1} parent=1 // pred_fallthru
      _
    // Predicated region
    $region30: #{selection_mlp_forward.1} parent=1 // pred_check
      _
    $region31: #{selection_mlp_forward.1} parent=1 // pred_check_branch
      %66 = sbr.rel (0) target = $region33
    $region32: #{selection_mlp_forward.1} parent=1 // pred_region
      _
    $region33: #{selection_mlp_forward.1} parent=1 // pred_fallthru
      _
    // Predicated region
    $region34: #{selection_mlp_forward.1} parent=1 // pred_check
      _
    $region35: #{selection_mlp_forward.1} parent=1 // pred_check_branch
      %68 = sbr.rel (0) target = $region37
    $region36: #{selection_mlp_forward.1} parent=1 // pred_region
      _
    $region37: #{selection_mlp_forward.1} parent=1 // pred_fallthru
      _
    // Predicated region
    $region38: #{selection_mlp_forward.1} parent=1 // pred_check
      _
    $region39: #{selection_mlp_forward.1} parent=1 // pred_check_branch
      %70 = sbr.rel (0) target = $region41
    $region40: #{selection_mlp_forward.1} parent=1 // pred_region
      _
    $region41: #{selection_mlp_forward.1} parent=1 // pred_fallthru
      _
    // Predicated region
    $region42: #{selection_mlp_forward.1} parent=1 // pred_check
      _
    $region43: #{selection_mlp_forward.1} parent=1 // pred_check_branch
      %72 = sbr.rel (0) target = $region45
    $region44: #{selection_mlp_forward.1} parent=1 // pred_region
      _
    $region45: #{selection_mlp_forward.1} parent=1 // pred_fallthru
      _
    // Predicated region
    $region46: #{selection_mlp_forward.1} parent=1 // pred_check
      _
    $region47: #{selection_mlp_forward.1} parent=1 // pred_check_branch
      %74 = sbr.rel (0) target = $region49
    $region48: #{selection_mlp_forward.1} parent=1 // pred_region
      %76 = dma.done [#allocation3], 512
    $region49: #{selection_mlp_forward.1} parent=1 // pred_fallthru
      _
    // Predicated region
    $region50: #{selection_mlp_forward.1} parent=1 // pred_check
      _
    $region51: #{selection_mlp_forward.1} parent=1 // pred_check_branch
      %78 = sbr.rel (0) target = $region53
    $region52: #{selection_mlp_forward.1} parent=1 // pred_region
      %80 = dma.done [#allocation5], 2048
    $region53: #{selection_mlp_forward.1} parent=1 // pred_fallthru
      _
    // Predicated region
    $region54: #{selection_mlp_forward.1} parent=1 // pred_check
      _
    $region55: #{selection_mlp_forward.1} parent=1 // pred_check_branch
      %82 = sbr.rel (0) target = $region57
    $region56: #{selection_mlp_forward.1} parent=1 // pred_region
      %84 = dma.done [#allocation5], 2048
    $region57: #{selection_mlp_forward.1} parent=1 // pred_fallthru
      _
    %v86 = vld [vmem:[%s0] sm:$0xf]
    %v87 = vld [vmem:[%s0 + $0x4] sm:$0xf]
    %v88 = vld [vmem:[%s1] sm:$0xf]
    %v89 = vld [vmem:[%s1 + $0x4] sm:$0xf]
    %v90 = vld [vmem:[%s6] sm:$0x1]
    %v92 = vperm.slane %v90, 0
    %v96 = vunpack.c.l.b16 %v86
    %v97 = vunpack.c.l.b16 %v87
    %v98 = vpack.c.b16 %v97, %v96
    %v101 = vunpack.c.l.b16 %v88
    %v102 = vunpack.c.l.b16 %v89
    %v103 = vpack.c.b16 %v102, %v101
    %vm105 = vcmask 130048
    %v107 = vsel %vm105, %v98, 0
    %109 = vmatpush.bf16.msra.mxu0 0
    %110 = vmatpush.bf16.msra.mxu0 0
    %111 = vmatpush.bf16.msra.mxu0 0
    %112 = vmatpush.bf16.msra.mxu0 0
    %113 = vmatpush.bf16.msra.mxu0 0
    %114 = vmatpush.bf16.msra.mxu0 0
    %115 = vmatpush.bf16.msra.mxu0 0
    %116 = vmatpush.bf16.msra.mxu0 %v103
    %117 = vmatmul.bf16.gmra.mxu0 %v107
    %v118 = vpop.f32.mrf.mxu0
    %v119 = vadd.f32 %v92, %v118
    %v120 = vpop.f32.mrf.mxu0
    %v121 = vadd.f32 %v92, %v120
    %122 = vdwg.mxu0
    %vm123 = vcmp.ge.f32.partialorder %v119, 0.0
    %vm124 = vcmp.ge.f32.partialorder %v121, 0.0
    %v125 = vmul.f32 %v119, 0.2
    %v126 = vmul.f32 %v121, 0.2
    %v127 = vsel %vm123, %v119, %v125
    %v128 = vsel %vm124, %v121, %v126
    %v129 = vpack.c.bf16 %v128, %v127
    %v130 = vld [vmem:[%s2] sm:$0xf]
    %v131 = vld [vmem:[%s2 + $0x4] sm:$0xf]
    %v132 = vld [vmem:[%s2 + $0x8] sm:$0xf]
    %v133 = vld [vmem:[%s2 + $0xc] sm:$0xf]
    %v134 = vld [vmem:[%s7] sm:$0x1]
    %v136 = vperm.slane %v134, 0
    %v142 = vunpack.c.l.b16 %v130
    %v143 = vunpack.c.l.b16 %v131
    %v144 = vunpack.c.l.b16 %v132
    %v145 = vunpack.c.l.b16 %v133
    %v146 = vpack.c.b16 %v143, %v142
    %v147 = vpack.c.b16 %v145, %v144
    %vm150 = vcmask 261120
    %v152 = vsel %vm150, %v129, 0
    %154 = vmatpush.bf16.msra.mxu0 0
    %155 = vmatpush.bf16.msra.mxu0 0
    %156 = vmatpush.bf16.msra.mxu0 0
    %157 = vmatpush.bf16.msra.mxu0 0
    %158 = vmatpush.bf16.msra.mxu0 0
    %159 = vmatpush.bf16.msra.mxu0 0
    %160 = vmatpush.bf16.msra.mxu0 %v147
    %161 = vmatpush.bf16.msra.mxu0 %v146
    %162 = vmatmul.bf16.gmra.mxu0 %v152
    %v163 = vpop.f32.mrf.mxu0
    %v164 = vadd.f32 %v136, %v163
    %v165 = vpop.f32.mrf.mxu0
    %v166 = vadd.f32 %v136, %v165
    %167 = vdwg.mxu0
    %vm168 = vcmp.ge.f32.partialorder %v164, 0.0
    %vm169 = vcmp.ge.f32.partialorder %v166, 0.0
    %v170 = vmul.f32 %v164, 0.2
    %v171 = vmul.f32 %v166, 0.2
    %v172 = vsel %vm168, %v164, %v170
    %v173 = vsel %vm169, %v166, %v171
    %v174 = vpack.c.bf16 %v173, %v172
    %v175 = vld [vmem:[#allocation2] sm:$0xf]
    %v176 = vld [vmem:[#allocation2 + $0x4] sm:$0xf]
    %v177 = vld [vmem:[#allocation2 + $0x8] sm:$0xf]
    %v178 = vld [vmem:[#allocation2 + $0xc] sm:$0xf]
    %v179 = vld [vmem:[#allocation2 + $0x10] sm:$0xf]
    %v180 = vld [vmem:[#allocation2 + $0x14] sm:$0xf]
    %v181 = vld [vmem:[#allocation2 + $0x18] sm:$0xf]
    %v182 = vld [vmem:[#allocation2 + $0x1c] sm:$0xf]
    %v183 = vld [vmem:[%s8] sm:$0x1]
    %v185 = vperm.slane %v183, 0
    %v195 = vunpack.c.l.b16 %v175
    %v196 = vunpack.c.l.b16 %v176
    %v197 = vunpack.c.l.b16 %v177
    %v198 = vunpack.c.l.b16 %v178
    %v199 = vunpack.c.l.b16 %v179
    %v200 = vunpack.c.l.b16 %v180
    %v201 = vunpack.c.l.b16 %v181
    %v202 = vunpack.c.l.b16 %v182
    %v203 = vpack.c.b16 %v196, %v195
    %v204 = vpack.c.b16 %v198, %v197
    %v205 = vpack.c.b16 %v200, %v199
    %v206 = vpack.c.b16 %v202, %v201
    %vm211 = vcmask 523264
    %v213 = vsel %vm211, %v174, 0
    %215 = vmatpush.bf16.msra.mxu0 0
    %216 = vmatpush.bf16.msra.mxu0 0
    %217 = vmatpush.bf16.msra.mxu0 0
    %218 = vmatpush.bf16.msra.mxu0 0
    %219 = vmatpush.bf16.msra.mxu0 %v206
    %220 = vmatpush.bf16.msra.mxu0 %v205
    %221 = vmatpush.bf16.msra.mxu0 %v204
    %222 = vmatpush.bf16.msra.mxu0 %v203
    %223 = vmatmul.bf16.gmra.mxu0 %v213
    %v224 = vpop.f32.mrf.mxu0
    %v225 = vadd.f32 %v185, %v224
    %v226 = vpop.f32.mrf.mxu0
    %v227 = vadd.f32 %v185, %v226
    %228 = vdwg.mxu0
    %vm229 = vcmp.ge.f32.partialorder %v225, 0.0
    %vm230 = vcmp.ge.f32.partialorder %v227, 0.0
    %v231 = vmul.f32 %v225, 0.2
    %v232 = vmul.f32 %v227, 0.2
    %v233 = vsel %vm229, %v225, %v231
    %v234 = vsel %vm230, %v227, %v232
    %v235 = vpack.c.bf16 %v234, %v233
    %v236 = vld [vmem:[#allocation4] sm:$0xff]
    %v237 = vld [vmem:[#allocation4 + $0x8] sm:$0xff]
    %v238 = vld [vmem:[#allocation4 + $0x10] sm:$0xff]
    %v239 = vld [vmem:[#allocation4 + $0x18] sm:$0xff]
    %v240 = vld [vmem:[#allocation4 + $0x20] sm:$0xff]
    %v241 = vld [vmem:[#allocation4 + $0x28] sm:$0xff]
    %v242 = vld [vmem:[#allocation4 + $0x30] sm:$0xff]
    %v243 = vld [vmem:[#allocation4 + $0x38] sm:$0xff]
    %v244 = vld [vmem:[#allocation4 + $0x40] sm:$0xff]
    %v245 = vld [vmem:[#allocation4 + $0x48] sm:$0xff]
    %v246 = vld [vmem:[#allocation4 + $0x50] sm:$0xff]
    %v247 = vld [vmem:[#allocation4 + $0x58] sm:$0xff]
    %v248 = vld [vmem:[#allocation4 + $0x60] sm:$0xff]
    %v249 = vld [vmem:[#allocation4 + $0x68] sm:$0xff]
    %v250 = vld [vmem:[#allocation4 + $0x70] sm:$0xff]
    %v251 = vld [vmem:[#allocation4 + $0x78] sm:$0xff]
    %v252 = vld [vmem:[%s9] sm:$0x3]
    %v254 = vperm.slane %v252, 0
    %v255 = vperm.slane %v252, 1
    %v274 = vunpack.c.l.b16 %v236
    %v275 = vunpack.c.h.b16 %v236
    %v276 = vunpack.c.l.b16 %v237
    %v277 = vunpack.c.h.b16 %v237
    %v278 = vunpack.c.l.b16 %v238
    %v279 = vunpack.c.h.b16 %v238
    %v280 = vunpack.c.l.b16 %v239
    %v281 = vunpack.c.h.b16 %v239
    %v282 = vunpack.c.l.b16 %v240
    %v283 = vunpack.c.h.b16 %v240
    %v284 = vunpack.c.l.b16 %v241
    %v285 = vunpack.c.h.b16 %v241
    %v286 = vunpack.c.l.b16 %v242
    %v287 = vunpack.c.h.b16 %v242
    %v288 = vunpack.c.l.b16 %v243
    %v289 = vunpack.c.h.b16 %v243
    %v290 = vunpack.c.l.b16 %v244
    %v291 = vunpack.c.h.b16 %v244
    %v292 = vunpack.c.l.b16 %v245
    %v293 = vunpack.c.h.b16 %v245
    %v294 = vunpack.c.l.b16 %v246
    %v295 = vunpack.c.h.b16 %v246
    %v296 = vunpack.c.l.b16 %v247
    %v297 = vunpack.c.h.b16 %v247
    %v298 = vunpack.c.l.b16 %v248
    %v299 = vunpack.c.h.b16 %v248
    %v300 = vunpack.c.l.b16 %v249
    %v301 = vunpack.c.h.b16 %v249
    %v302 = vunpack.c.l.b16 %v250
    %v303 = vunpack.c.h.b16 %v250
    %v304 = vunpack.c.l.b16 %v251
    %v305 = vunpack.c.h.b16 %v251
    %v306 = vpack.c.b16 %v276, %v274
    %v307 = vpack.c.b16 %v277, %v275
    %v308 = vpack.c.b16 %v280, %v278
    %v309 = vpack.c.b16 %v281, %v279
    %v310 = vpack.c.b16 %v284, %v282
    %v311 = vpack.c.b16 %v285, %v283
    %v312 = vpack.c.b16 %v288, %v286
    %v313 = vpack.c.b16 %v289, %v287
    %v314 = vpack.c.b16 %v292, %v290
    %v315 = vpack.c.b16 %v293, %v291
    %v316 = vpack.c.b16 %v296, %v294
    %v317 = vpack.c.b16 %v297, %v295
    %v318 = vpack.c.b16 %v300, %v298
    %v319 = vpack.c.b16 %v301, %v299
    %v320 = vpack.c.b16 %v304, %v302
    %v321 = vpack.c.b16 %v305, %v303
    %338 = vmatpush.bf16.msra.mxu0 %v320
    %339 = vmatpush.bf16.msra.mxu0 %v318
    %340 = vmatpush.bf16.msra.mxu0 %v316
    %341 = vmatpush.bf16.msra.mxu0 %v314
    %342 = vmatpush.bf16.msra.mxu0 %v312
    %343 = vmatpush.bf16.msra.mxu0 %v310
    %344 = vmatpush.bf16.msra.mxu0 %v308
    %345 = vmatpush.bf16.msra.mxu0 %v306
    %346 = vmatmul.bf16.gmra.mxu0 %v235
    %v347 = vpop.f32.mrf.mxu0
    %v348 = vadd.f32 %v254, %v347
    %v349 = vpop.f32.mrf.mxu0
    %v350 = vadd.f32 %v254, %v349
    %351 = vdwg.mxu0
    %352 = vmatpush.bf16.msra.mxu0 %v321
    %353 = vmatpush.bf16.msra.mxu0 %v319
    %354 = vmatpush.bf16.msra.mxu0 %v317
    %355 = vmatpush.bf16.msra.mxu0 %v315
    %356 = vmatpush.bf16.msra.mxu0 %v313
    %357 = vmatpush.bf16.msra.mxu0 %v311
    %358 = vmatpush.bf16.msra.mxu0 %v309
    %359 = vmatpush.bf16.msra.mxu0 %v307
    %360 = vmatmul.bf16.gmra.mxu0 %v235
    %v361 = vpop.f32.mrf.mxu0
    %v362 = vadd.f32 %v255, %v361
    %v363 = vpop.f32.mrf.mxu0
    %v364 = vadd.f32 %v255, %v363
    %365 = vdwg.mxu0
    %vm366 = vcmp.ge.f32.partialorder %v348, 0.0
    %vm367 = vcmp.ge.f32.partialorder %v362, 0.0
    %vm368 = vcmp.ge.f32.partialorder %v350, 0.0
    %vm369 = vcmp.ge.f32.partialorder %v364, 0.0
    %v370 = vmul.f32 %v348, 0.2
    %v371 = vmul.f32 %v362, 0.2
    %v372 = vmul.f32 %v350, 0.2
    %v373 = vmul.f32 %v364, 0.2
    %v374 = vsel %vm366, %v348, %v370
    %v375 = vsel %vm367, %v362, %v371
    %v376 = vsel %vm368, %v350, %v372
    %v377 = vsel %vm369, %v364, %v373
    %v378 = vpack.c.bf16 %v376, %v374
    %v379 = vpack.c.bf16 %v377, %v375
    %v380 = vld [vmem:[#allocation6] sm:$0xf]
    %v381 = vld [vmem:[#allocation6 + $0x4] sm:$0xf]
    %v382 = vld [vmem:[#allocation6 + $0x8] sm:$0xf]
    %v383 = vld [vmem:[#allocation6 + $0xc] sm:$0xf]
    %v384 = vld [vmem:[#allocation6 + $0x10] sm:$0xf]
    %v385 = vld [vmem:[#allocation6 + $0x14] sm:$0xf]
    %v386 = vld [vmem:[#allocation6 + $0x18] sm:$0xf]
    %v387 = vld [vmem:[#allocation6 + $0x1c] sm:$0xf]
    %v388 = vld [vmem:[#allocation6 + $0x20] sm:$0xf]
    %v389 = vld [vmem:[#allocation6 + $0x24] sm:$0xf]
    %v390 = vld [vmem:[#allocation6 + $0x28] sm:$0xf]
    %v391 = vld [vmem:[#allocation6 + $0x2c] sm:$0xf]
    %v392 = vld [vmem:[#allocation6 + $0x30] sm:$0xf]
    %v393 = vld [vmem:[#allocation6 + $0x34] sm:$0xf]
    %v394 = vld [vmem:[#allocation6 + $0x38] sm:$0xf]
    %v395 = vld [vmem:[#allocation6 + $0x3c] sm:$0xf]
    %v396 = vld [vmem:[#allocation6 + $0x40] sm:$0xf]
    %v397 = vld [vmem:[#allocation6 + $0x44] sm:$0xf]
    %v398 = vld [vmem:[#allocation6 + $0x48] sm:$0xf]
    %v399 = vld [vmem:[#allocation6 + $0x4c] sm:$0xf]
    %v400 = vld [vmem:[#allocation6 + $0x50] sm:$0xf]
    %v401 = vld [vmem:[#allocation6 + $0x54] sm:$0xf]
    %v402 = vld [vmem:[#allocation6 + $0x58] sm:$0xf]
    %v403 = vld [vmem:[#allocation6 + $0x5c] sm:$0xf]
    %v404 = vld [vmem:[#allocation6 + $0x60] sm:$0xf]
    %v405 = vld [vmem:[#allocation6 + $0x64] sm:$0xf]
    %v406 = vld [vmem:[#allocation6 + $0x68] sm:$0xf]
    %v407 = vld [vmem:[#allocation6 + $0x6c] sm:$0xf]
    %v408 = vld [vmem:[#allocation6 + $0x70] sm:$0xf]
    %v409 = vld [vmem:[#allocation6 + $0x74] sm:$0xf]
    %v410 = vld [vmem:[#allocation6 + $0x78] sm:$0xf]
    %v411 = vld [vmem:[#allocation6 + $0x7c] sm:$0xf]
    %v412 = vld [vmem:[%s10] sm:$0x1]
    %v414 = vperm.slane %v412, 0
    %v448 = vunpack.c.l.b16 %v380
    %v449 = vunpack.c.l.b16 %v381
    %v450 = vunpack.c.l.b16 %v382
    %v451 = vunpack.c.l.b16 %v383
    %v452 = vunpack.c.l.b16 %v384
    %v453 = vunpack.c.l.b16 %v385
    %v454 = vunpack.c.l.b16 %v386
    %v455 = vunpack.c.l.b16 %v387
    %v456 = vunpack.c.l.b16 %v388
    %v457 = vunpack.c.l.b16 %v389
    %v458 = vunpack.c.l.b16 %v390
    %v459 = vunpack.c.l.b16 %v391
    %v460 = vunpack.c.l.b16 %v392
    %v461 = vunpack.c.l.b16 %v393
    %v462 = vunpack.c.l.b16 %v394
    %v463 = vunpack.c.l.b16 %v395
    %v464 = vunpack.c.l.b16 %v396
    %v465 = vunpack.c.l.b16 %v397
    %v466 = vunpack.c.l.b16 %v398
    %v467 = vunpack.c.l.b16 %v399
    %v468 = vunpack.c.l.b16 %v400
    %v469 = vunpack.c.l.b16 %v401
    %v470 = vunpack.c.l.b16 %v402
    %v471 = vunpack.c.l.b16 %v403
    %v472 = vunpack.c.l.b16 %v404
    %v473 = vunpack.c.l.b16 %v405
    %v474 = vunpack.c.l.b16 %v406
    %v475 = vunpack.c.l.b16 %v407
    %v476 = vunpack.c.l.b16 %v408
    %v477 = vunpack.c.l.b16 %v409
    %v478 = vunpack.c.l.b16 %v410
    %v479 = vunpack.c.l.b16 %v411
    %v480 = vpack.c.b16 %v449, %v448
    %v481 = vpack.c.b16 %v451, %v450
    %v482 = vpack.c.b16 %v453, %v452
    %v483 = vpack.c.b16 %v455, %v454
    %v484 = vpack.c.b16 %v457, %v456
    %v485 = vpack.c.b16 %v459, %v458
    %v486 = vpack.c.b16 %v461, %v460
    %v487 = vpack.c.b16 %v463, %v462
    %v488 = vpack.c.b16 %v465, %v464
    %v489 = vpack.c.b16 %v467, %v466
    %v490 = vpack.c.b16 %v469, %v468
    %v491 = vpack.c.b16 %v471, %v470
    %v492 = vpack.c.b16 %v473, %v472
    %v493 = vpack.c.b16 %v475, %v474
    %v494 = vpack.c.b16 %v477, %v476
    %v495 = vpack.c.b16 %v479, %v478
    %512 = vmatpush.bf16.msra.mxu0 %v487
    %513 = vmatpush.bf16.msra.mxu0 %v486
    %514 = vmatpush.bf16.msra.mxu0 %v485
    %515 = vmatpush.bf16.msra.mxu0 %v484
    %516 = vmatpush.bf16.msra.mxu0 %v483
    %517 = vmatpush.bf16.msra.mxu0 %v482
    %518 = vmatpush.bf16.msra.mxu0 %v481
    %519 = vmatpush.bf16.msra.mxu0 %v480
    %520 = vmatmul.bf16.gmra.mxu0 %v378
    %v521 = vpop.f32.mrf.mxu0
    %v522 = vadd.f32 %v414, %v521
    %v523 = vpop.f32.mrf.mxu0
    %v524 = vadd.f32 %v414, %v523
    %525 = vdwg.mxu0
    %526 = vmatpush.bf16.msra.mxu0 %v495
    %527 = vmatpush.bf16.msra.mxu0 %v494
    %528 = vmatpush.bf16.msra.mxu0 %v493
    %529 = vmatpush.bf16.msra.mxu0 %v492
    %530 = vmatpush.bf16.msra.mxu0 %v491
    %531 = vmatpush.bf16.msra.mxu0 %v490
    %532 = vmatpush.bf16.msra.mxu0 %v489
    %533 = vmatpush.bf16.msra.mxu0 %v488
    %534 = vmatmul.bf16.gmra.mxu0 %v379
    %v535 = vpop.f32.mrf.mxu0
    %v536 = vadd.f32 %v522, %v535
    %v537 = vpop.f32.mrf.mxu0
    %v538 = vadd.f32 %v524, %v537
    %539 = vdwg.mxu0
    %540 = vst [vmem:[%s11] sm:$0xff] %v536
    %541 = vst [vmem:[%s11 + $0x8] sm:$0xff] %v538
    // Predicated region
    $region58: #{selection_mlp_forward.1} parent=1 // pred_check
      _
    $region59: #{selection_mlp_forward.1} parent=1 // pred_check_branch
      %543 = sbr.rel (0) target = $region61
    $region60: #{selection_mlp_forward.1} parent=1 // pred_region
      _
    $region61: #{selection_mlp_forward.1} parent=1 // pred_fallthru
      _
    // Predicated region
    $region62: #{selection_mlp_forward.1} parent=1 // pred_check
      _
    $region63: #{selection_mlp_forward.1} parent=1 // pred_check_branch
      %545 = sbr.rel (0) target = $region65
    $region64: #{selection_mlp_forward.1} parent=1 // pred_region
      _
    $region65: #{selection_mlp_forward.1} parent=1 // pred_fallthru
      _
    %546 = vsyncpa [#allocation3], 1
    %547 = vsyncpa [#allocation5], 1

</llo_original>
